<compile_context>
chip_gen: v5e
topology: v5e:2x2
jax: 0.10.0
libtpu: 0.0.40
codegen_flags: <defaults>
</compile_context>

<pallas_src>
import math
from functools import partial

import jax
import jax.numpy as jnp
from jax.experimental import pallas as pl
from jax.experimental.pallas import tpu as pltpu


# --------------------------------------------------------------------------
# helpers
# --------------------------------------------------------------------------
def _round_up(x, m):
    return (x + m - 1) // m * m


def _pick_tile(n, candidates, min_tiles=1):
    """Largest candidate tile that divides n and gives >= min_tiles tiles."""
    for c in candidates:
        if n % c == 0 and n // c >= min_tiles:
            return c
    return n


def _pad2d(x, rows, cols):
    return jnp.pad(x, ((0, rows - x.shape[0]), (0, cols - x.shape[1])))


# --------------------------------------------------------------------------
# fused GCN-layer propagation kernel
#
#   grid = (row tiles i, K tiles k);  A is streamed (tm, tk) tiles;
#   the feature operand M is fully VMEM-resident (constant index_map) and
#   sliced per K-step with pl.ds.  f32 VMEM accumulator; epilogue on the
#   last K tile does  bias (+ ReLU) (+ fused next-layer weight matmul).
# --------------------------------------------------------------------------
def _gcn_layer_kernel(a_ref, m_ref, b_ref, *rest,
                      tk, apply_relu, fuse_in, fuse_out):
    idx = 0
    w_in_ref = rest[idx] if fuse_in else None
    idx += int(fuse_in)
    w_out_ref = rest[idx] if fuse_out else None
    idx += int(fuse_out)
    o_ref = rest[idx]
    acc_ref = rest[idx + 1]

    k = pl.program_id(1)

    @pl.when(k == 0)
    def _():
        acc_ref[...] = jnp.zeros_like(acc_ref)

    # Resident feature operand: slice this step's K-window (no HBM re-read).
    off = pl.multiple_of(k * tk, tk)
    m_tile = m_ref[pl.ds(off, tk), :]

    if fuse_in:
        # Fused feature transform: (tk, F) @ (F, H) — recompute per row tile
        # is free (memory-bound kernel), f32 MXU accumulation, bf16 result.
        m_tile = jnp.dot(m_tile, w_in_ref[...],
                         preferred_element_type=jnp.float32).astype(a_ref.dtype)

    acc_ref[...] += jnp.dot(a_ref[...], m_tile,
                            preferred_element_type=jnp.float32)

    @pl.when(k == pl.num_programs(1) - 1)
    def _():
        out = acc_ref[...] + b_ref[...]          # bias once, f32 epilogue
        if apply_relu:
            out = jnp.maximum(out, 0.0)
        if fuse_out:
            # Fused next-layer feature transform: (tm, H1) @ (H1, H2).
            out = jnp.dot(out.astype(w_out_ref.dtype), w_out_ref[...],
                          preferred_element_type=jnp.float32)
        o_ref[...] = out.astype(o_ref.dtype)


def gcn_layer(a, m, b, *, w_in=None, w_out=None, apply_relu, out_dtype):
    """One fused GCN layer:  out = [relu](A @ (M [@ W_in]) + b) [@ W_out]."""
    n, _ = a.shape
    h_feat = m.shape[1]                                   # width of M
    h_mid = w_in.shape[1] if w_in is not None else h_feat  # width after W_in
    h_out = w_out.shape[1] if w_out is not None else h_mid

    fuse_in = w_in is not None
    fuse_out = w_out is not None

    # Bigger tiles (HBM roofline), prefer >= 2 row tiles for v7x megacore.
    tm = _pick_tile(n, (512, 256, 128), min_tiles=2)
    tk = _pick_tile(n, (2048, 1024, 512, 256, 128))

    in_specs = [
        pl.BlockSpec((tm, tk), lambda i, k: (i, k)),      # A tile (streamed)
        pl.BlockSpec((n, h_feat), lambda i, k: (0, 0)),   # M: VMEM-resident
        pl.BlockSpec((1, h_mid), lambda i, k: (0, 0)),    # bias row
    ]
    inputs = [a, m, b]
    if fuse_in:
        in_specs.append(pl.BlockSpec((h_feat, h_mid), lambda i, k: (0, 0)))
        inputs.append(w_in)
    if fuse_out:
        in_specs.append(pl.BlockSpec((h_mid, h_out), lambda i, k: (0, 0)))
        inputs.append(w_out)

    out_itemsize = jnp.dtype(out_dtype).itemsize

    # Explicit VMEM budget (double-buffered inputs + resident operands).
    est = 2 * tm * tk * a.dtype.itemsize            # A tiles
    est += 2 * n * h_feat * m.dtype.itemsize        # resident features
    est += 2 * h_mid * 4                            # bias (f32)
    if fuse_in:
        est += 2 * h_feat * h_mid * w_in.dtype.itemsize
    if fuse_out:
        est += 2 * h_mid * h_out * w_out.dtype.itemsize
    est += tm * h_mid * 4                           # f32 accumulator
    est += 2 * tm * h_out * out_itemsize            # output buffers
    vmem_limit = int(min(max(est + (8 << 20), 32 << 20), 64 << 20))

    flops = 2 * n * n * h_mid
    if fuse_in:
        flops += 2 * n * h_feat * h_mid * (n // tm)   # per-row-tile recompute
    if fuse_out:
        flops += 2 * n * h_mid * h_out
    bytes_accessed = (
        n * n * a.dtype.itemsize                      # A streamed once
        + n * h_feat * m.dtype.itemsize               # M read once (resident)
        + (h_feat * h_mid * 2 if fuse_in else 0)
        + (h_mid * h_out * 2 if fuse_out else 0)
        + n * h_out * out_itemsize
    )

    kernel = partial(_gcn_layer_kernel, tk=tk, apply_relu=apply_relu,
                     fuse_in=fuse_in, fuse_out=fuse_out)

    return pl.pallas_call(
        kernel,
        out_shape=jax.ShapeDtypeStruct((n, h_out), out_dtype),
        grid_spec=pltpu.PrefetchScalarGridSpec(
            num_scalar_prefetch=0,
            grid=(n // tm, n // tk),
            in_specs=in_specs,
            out_specs=pl.BlockSpec((tm, h_out), lambda i, k: (i, 0)),
            scratch_shapes=[pltpu.VMEM((tm, h_mid), jnp.float32)],
        ),
        compiler_params=pltpu.CompilerParams(
            dimension_semantics=("parallel", "arbitrary"),
            vmem_limit_bytes=vmem_limit,
        ),
        cost_estimate=pl.CostEstimate(
            flops=flops, transcendentals=0, bytes_accessed=bytes_accessed),
    )(*inputs)


# --------------------------------------------------------------------------
# full forward pass (2x GCNConv + ReLU + eval-mode dropout), two pallas_calls
# --------------------------------------------------------------------------
def gnn_forward(a_norm, x, w1, b1, w2, b2):
    n, f = x.shape
    h1 = w1.shape[1]
    h2 = w2.shape[1]

    n_pad = _round_up(n, 128)
    f_pad = _round_up(f, 128)
    h1_pad = _round_up(h1, 128)
    h2_pad = _round_up(h2, 128)

    # bf16 matmul operands (f32 accumulation inside the kernels), lane-padded.
    # NOTE: padded columns/rows of A are zero, so any nonzero values in padded
    # rows of the hidden features (e.g. relu(b1)) never leak into valid rows;
    # the final result is additionally sliced back to [:n, :h2].
    a_bf = _pad2d(a_norm, n_pad, n_pad).astype(jnp.bfloat16)
    x_bf = _pad2d(x, n_pad, f_pad).astype(jnp.bfloat16)
    w1_bf = _pad2d(w1, f_pad, h1_pad).astype(jnp.bfloat16)
    w2_bf = _pad2d(w2, h1_pad, h2_pad).astype(jnp.bfloat16)
    b1_p = _pad2d(b1, 1, h1_pad).astype(jnp.float32)
    b2_p = _pad2d(b2, 1, h2_pad).astype(jnp.float32)

    # Layer 1 (fully fused):  M2 = relu(A @ (X @ W1) + b1) @ W2
    m2 = gcn_layer(a_bf, x_bf, b1_p, w_in=w1_bf, w_out=w2_bf,
                   apply_relu=True, out_dtype=jnp.bfloat16)

    # dropout: identity in eval mode (see TODO at top for training mode).

    # Layer 2:  out = A @ M2 + b2
    out = gcn_layer(a_bf, m2, b2_p, apply_relu=False, out_dtype=jnp.float32)
    return out[:n, :h2]


# --------------------------------------------------------------------------
# glue: dense GCN-normalized adjacency + glorot init
# --------------------------------------------------------------------------
def build_normalized_adjacency(edge_index, num_nodes):
    """Dense GCN-normalized adjacency: D^-1/2 (A + I) D^-1/2.

    Scatter-ADD so duplicate edges accumulate (matching PyG's scatter-add
    message passing); a self-loop of weight 1 is always added, as gcn_norm's
    add_self_loops does.
    """
    src = edge_index[0]
    dst = edge_index[1]
    adj = jnp.zeros((num_nodes, num_nodes), dtype=jnp.float32)
    adj = adj.at[dst, src].add(1.0)                     # message src -> dst
    adj = adj + jnp.eye(num_nodes, dtype=jnp.float32)   # self-loops
    deg = adj.sum(axis=1)
    dinv = jnp.where(deg > 0, 1.0 / jnp.sqrt(deg), 0.0)
    return dinv[:, None] * adj * dinv[None, :]


def glorot(key, shape):
    fan_in, fan_out = shape
    limit = math.sqrt(6.0 / (fan_in + fan_out))
    return jax.random.uniform(key, shape, jnp.float32, -limit, limit)


# --------------------------------------------------------------------------
if __name__ == "__main__":
    num_nodes = 16
    num_features = 16
    hidden_channels = 32
    num_edges = 40

    key = jax.random.PRNGKey(0)
    k_x, k_e, k_w1, k_w2 = jax.random.split(key, 4)

    # deterministic synthetic graph
    x = jax.random.normal(k_x, (num_nodes, num_features), dtype=jnp.float32)
    edge_index = jax.random.randint(k_e, (2, num_edges), 0, num_nodes)

    # deterministic parameter init (GCNConv: glorot weight, zero bias)
    w1 = glorot(k_w1, (num_features, hidden_channels))
    b1 = jnp.zeros((1, hidden_channels), dtype=jnp.float32)
    w2 = glorot(k_w2, (hidden_channels, hidden_channels))
    b2 = jnp.zeros((1, hidden_channels), dtype=jnp.float32)

    a_norm = build_normalized_adjacency(edge_index, num_nodes)

    out = gnn_forward(a_norm, x, w1, b1, w2, b2)
    jax.block_until_ready(out)

    # pure-JAX reference, emulating the kernel's bf16 quantization points
    # (f32 accumulation), so only accumulation-order differences remain.
    hp = jax.lax.Precision.HIGHEST

    def q(v):
        return v.astype(jnp.bfloat16).astype(jnp.float32)

    xw1_ref = q(jnp.dot(q(x), q(w1), precision=hp))
    h1_ref = jnp.maximum(jnp.dot(q(a_norm), xw1_ref, precision=hp) + b1, 0.0)
    m2_ref = q(jnp.dot(q(h1_ref), q(w2), precision=hp))
    out_ref = jnp.dot(q(a_norm), m2_ref, precision=hp) + b2

    assert out.shape == (num_nodes, hidden_channels)
    assert jnp.allclose(out, out_ref, atol=2e-2, rtol=2e-2)

    print("KERNEL_OK")
</pallas_src>

<mosaic_0001>
module attributes {stable_mosaic.version = 11 : i64} {
  func.func @_gcn_layer_kernel(%arg0: i32, %arg1: i32, %arg2: memref<128x128xbf16, #tpu.memory_space<vmem>>, %arg3: memref<128x128xbf16, #tpu.memory_space<vmem>>, %arg4: memref<1x128xf32, #tpu.memory_space<vmem>>, %arg5: memref<128x128xbf16, #tpu.memory_space<vmem>>, %arg6: memref<128x128xbf16, #tpu.memory_space<vmem>>, %arg7: memref<128x128xbf16, #tpu.memory_space<vmem>>, %arg8: memref<128x128xf32, #tpu.memory_space<vmem>>) attributes {dimension_semantics = [#tpu.dimension_semantics<parallel>, #tpu.dimension_semantics<arbitrary>], iteration_bounds = array<i64: 1, 1>, scalar_prefetch = 0 : i64, scratch_operands = 1 : i64, tpu.core_type = #tpu.core_type<tc>, window_params = [{transform_indices = @transform_0, window_bounds = array<i64: 128, 128>}, {pipeline_mode = #tpu.pipeline_mode<synchronous>, transform_indices = @transform_1, window_bounds = array<i64: 128, 128>}, {pipeline_mode = #tpu.pipeline_mode<synchronous>, transform_indices = @transform_2, window_bounds = array<i64: 1, 128>}, {pipeline_mode = #tpu.pipeline_mode<synchronous>, transform_indices = @transform_3, window_bounds = array<i64: 128, 128>}, {pipeline_mode = #tpu.pipeline_mode<synchronous>, transform_indices = @transform_4, window_bounds = array<i64: 128, 128>}, {transform_indices = @transform_5, window_bounds = array<i64: 128, 128>}]} {
    %c0_i32 = arith.constant 0 : i32
    %0 = arith.cmpi eq, %arg1, %c0_i32 : i32
    %1 = arith.extui %0 : i1 to i32
    %c0_i32_0 = arith.constant 0 : i32
    %2 = arith.cmpi ne, %1, %c0_i32_0 : i32
    scf.if %2 {
      %cst_12 = arith.constant 0.000000e+00 : f32
      %18 = vector.broadcast %cst_12 : f32 to vector<128x128xf32>
      %c0_13 = arith.constant 0 : index
      %c0_14 = arith.constant 0 : index
      %19 = vector.load %arg8[%c0_13, %c0_14] : memref<128x128xf32, #tpu.memory_space<vmem>>, vector<128x128xf32>
      tpu.vector_store %arg8[%c0_13, %c0_14], %18 {strides = array<i32>} : memref<128x128xf32, #tpu.memory_space<vmem>>, vector<128x128xf32>,
    } else {
    }
    %c128_i32 = arith.constant 128 : i32
    %3 = arith.muli %arg1, %c128_i32 : i32
    %4 = tpu.assume_multiple %3, 128 : i32
    %5 = arith.index_cast %4 : i32 to index
    %c0 = arith.constant 0 : index
    %6 = vector.load %arg3[%5, %c0] : memref<128x128xbf16, #tpu.memory_space<vmem>>, vector<128x128xbf16>
    %c0_1 = arith.constant 0 : index
    %c0_2 = arith.constant 0 : index
    %7 = vector.load %arg5[%c0_1, %c0_2] : memref<128x128xbf16, #tpu.memory_space<vmem>>, vector<128x128xbf16>
    %cst = arith.constant dense<0.000000e+00> : vector<128x128xf32>
    %8 = tpu.matmul %6, %7, %cst {dimension_numbers = #tpu.dot_dimension_numbers<[1], [0], [0], [1], [0, 0, 1, 1], [], []>} : vector<128x128xbf16>, vector<128x128xbf16>, vector<128x128xf32> -> vector<128x128xf32>
    %9 = arith.truncf %8 : vector<128x128xf32> to vector<128x128xbf16>
    %c0_3 = arith.constant 0 : index
    %c0_4 = arith.constant 0 : index
    %10 = vector.load %arg8[%c0_3, %c0_4] : memref<128x128xf32, #tpu.memory_space<vmem>>, vector<128x128xf32>
    %c0_5 = arith.constant 0 : index
    %c0_6 = arith.constant 0 : index
    %11 = vector.load %arg2[%c0_5, %c0_6] : memref<128x128xbf16, #tpu.memory_space<vmem>>, vector<128x128xbf16>
    %cst_7 = arith.constant dense<0.000000e+00> : vector<128x128xf32>
    %12 = tpu.matmul %11, %9, %cst_7 {dimension_numbers = #tpu.dot_dimension_numbers<[1], [0], [0], [1], [0, 0, 1, 1], [], []>} : vector<128x128xbf16>, vector<128x128xbf16>, vector<128x128xf32> -> vector<128x128xf32>
    %13 = arith.addf %10, %12 : vector<128x128xf32>
    %c0_8 = arith.constant 0 : index
    %c0_9 = arith.constant 0 : index
    %14 = vector.load %arg8[%c0_8, %c0_9] : memref<128x128xf32, #tpu.memory_space<vmem>>, vector<128x128xf32>
    tpu.vector_store %arg8[%c0_8, %c0_9], %13 {strides = array<i32>} : memref<128x128xf32, #tpu.memory_space<vmem>>, vector<128x128xf32>,
    %c0_i32_10 = arith.constant 0 : i32
    %15 = arith.cmpi eq, %arg1, %c0_i32_10 : i32
    %16 = arith.extui %15 : i1 to i32
    %c0_i32_11 = arith.constant 0 : i32
    %17 = arith.cmpi ne, %16, %c0_i32_11 : i32
    scf.if %17 {
      %c0_12 = arith.constant 0 : index
      %c0_13 = arith.constant 0 : index
      %18 = vector.load %arg8[%c0_12, %c0_13] : memref<128x128xf32, #tpu.memory_space<vmem>>, vector<128x128xf32>
      %c0_14 = arith.constant 0 : index
      %c0_15 = arith.constant 0 : index
      %19 = vector.load %arg4[%c0_14, %c0_15] : memref<1x128xf32, #tpu.memory_space<vmem>>, vector<1x128xf32>
      %20 = vector.broadcast %19 : vector<1x128xf32> to vector<128x128xf32>
      %21 = arith.addf %18, %20 : vector<128x128xf32>
      %cst_16 = arith.constant 0.000000e+00 : f32
      %22 = vector.broadcast %cst_16 : f32 to vector<128x128xf32>
      %23 = arith.maximumf %21, %22 : vector<128x128xf32>
      %24 = arith.truncf %23 : vector<128x128xf32> to vector<128x128xbf16>
      %c0_17 = arith.constant 0 : index
      %c0_18 = arith.constant 0 : index
      %25 = vector.load %arg6[%c0_17, %c0_18] : memref<128x128xbf16, #tpu.memory_space<vmem>>, vector<128x128xbf16>
      %cst_19 = arith.constant dense<0.000000e+00> : vector<128x128xf32>
      %26 = tpu.matmul %24, %25, %cst_19 {dimension_numbers = #tpu.dot_dimension_numbers<[1], [0], [0], [1], [0, 0, 1, 1], [], []>} : vector<128x128xbf16>, vector<128x128xbf16>, vector<128x128xf32> -> vector<128x128xf32>
      %27 = arith.truncf %26 : vector<128x128xf32> to vector<128x128xbf16>
      %c0_20 = arith.constant 0 : index
      %c0_21 = arith.constant 0 : index
      %28 = vector.load %arg7[%c0_20, %c0_21] : memref<128x128xbf16, #tpu.memory_space<vmem>>, vector<128x128xbf16>
      tpu.vector_store %arg7[%c0_20, %c0_21], %27 {strides = array<i32>} : memref<128x128xbf16, #tpu.memory_space<vmem>>, vector<128x128xbf16>,
    } else {
    }
    return
  }
  func.func @transform_0(%arg0: i32, %arg1: i32) -> (i32, i32) {
    %c0_i32 = arith.constant 0 : i32
    return %arg0, %arg1 : i32, i32
  }
  func.func @transform_1(%arg0: i32, %arg1: i32) -> (i32, i32) {
    %c0_i32 = arith.constant 0 : i32
    %c0_i32_0 = arith.constant 0 : i32
    %c0_i32_1 = arith.constant 0 : i32
    return %c0_i32, %c0_i32_0 : i32, i32
  }
  func.func @transform_2(%arg0: i32, %arg1: i32) -> (i32, i32) {
    %c0_i32 = arith.constant 0 : i32
    %c0_i32_0 = arith.constant 0 : i32
    %c0_i32_1 = arith.constant 0 : i32
    return %c0_i32, %c0_i32_0 : i32, i32
  }
  func.func @transform_3(%arg0: i32, %arg1: i32) -> (i32, i32) {
    %c0_i32 = arith.constant 0 : i32
    %c0_i32_0 = arith.constant 0 : i32
    %c0_i32_1 = arith.constant 0 : i32
    return %c0_i32, %c0_i32_0 : i32, i32
  }
  func.func @transform_4(%arg0: i32, %arg1: i32) -> (i32, i32) {
    %c0_i32 = arith.constant 0 : i32
    %c0_i32_0 = arith.constant 0 : i32
    %c0_i32_1 = arith.constant 0 : i32
    return %c0_i32, %c0_i32_0 : i32, i32
  }
  func.func @transform_5(%arg0: i32, %arg1: i32) -> (i32, i32) {
    %c0_i32 = arith.constant 0 : i32
    %c0_i32_0 = arith.constant 0 : i32
    return %arg0, %c0_i32 : i32, i32
  }
}

</mosaic_0001>

<llo_original>
// kernel: tpu_custom_call.1
$region0: #{tpu_custom_call.1}
  #allocation0 [shape = 'u32[]', space=smem, size = 0x4, offset = 0x4, fixed_abs, tag = 'smem constant byte address 0x4 - core index']
  #allocation1 [shape = 'u32[72,128]{1,0:T(1,128)}', space=vmem, size = 0x9000, scoped, tag = 'internal scratch']
  #allocation2 [shape = 'f32[128,128]{1,0:T(8,128)}', space=vmem, size = 0x10000, scoped, tag = 'scratch operand']
  %s0 = inlined_call_operand.hbm [shape: bf16[128,128], index: 0, kind: input, shape index: {}]
  %s1 = inlined_call_operand.hbm [shape: bf16[128,128], index: 1, kind: input, shape index: {}]
  %s2 = inlined_call_operand.vmem [shape: f32[1,128], index: 2, kind: input, shape index: {}]
  %s3 = inlined_call_operand.hbm [shape: bf16[128,128], index: 3, kind: input, shape index: {}]
  %s4 = inlined_call_operand.hbm [shape: bf16[128,128], index: 4, kind: input, shape index: {}]
  %s5 = inlined_call_operand.hbm [shape: bf16[128,128], index: 5, kind: output, shape index: {}]
  %s6 = sld [smem:[#allocation0]]
  $region54: #{tpu_custom_call.1} parent=0
    _
  %s8 = ssub.s32 1, %s6
  %s9 = scalar_select 0, %s8, %s6
  $region1: #{tpu_custom_call.1} parent=0
    #allocation3 [shape = 'u8[32768]{0}', space=vmem, size = 0x8000, scoped, tag = 'input window, operand 0, single buffered']
    #allocation4 [shape = 's32[1]{0}', space=sflag, size = 0x4, scoped, tag = 'scoped memory for tpu_custom_call.1']
    #allocation5 [shape = 's32[1]{0}', space=sflag, size = 0x4, scoped, tag = 'scoped memory for tpu_custom_call.1']
    #allocation6 [shape = 'u8[32768]{0}', space=vmem, size = 0x8000, scoped, tag = 'input window, operand 1, single buffered']
    #allocation7 [shape = 's32[1]{0}', space=sflag, size = 0x4, scoped, tag = 'scoped memory for tpu_custom_call.1']
    #allocation8 [shape = 'u8[32768]{0}', space=vmem, size = 0x8000, scoped, tag = 'input window, operand 3, single buffered']
    #allocation9 [shape = 'u8[32768]{0}', space=vmem, size = 0x8000, scoped, tag = 'input window, operand 4, single buffered']
    #allocation10 [shape = 's32[1]{0}', space=sflag, size = 0x4, scoped, tag = 'scoped memory for tpu_custom_call.1']
    #allocation11 [shape = 'u8[32768]{0}', space=vmem, size = 0x8000, scoped, tag = 'output window, operand 0, single buffered']
    %10 = vsyncpa [#allocation4], 0
    %11 = vsyncpa [#allocation7], 0
    %12 = vsyncpa [#allocation10], 0
    %13 = vsyncpa [#allocation5], 0
    // Predicated region
    $region2: #{tpu_custom_call.1} parent=1 // pred_check
      _
    $region3: #{tpu_custom_call.1} parent=1 // pred_check_branch
      %15 = sbr.rel (0) target = $region5
    $region4: #{tpu_custom_call.1} parent=1 // pred_region
      %17 = vsyncadd [#allocation4], 0
      %s18 = sshll.u32 %s0, 4
      %s19 = int_to_ptr.hbm [resolvable:$true] %s18
      %s20 = sshll.u32 [#allocation3], 4
      %s21 = int_to_ptr.vmem [resolvable:$true] %s20
      %26 = dma.hbm_to_vmem [thread:$0]  %s19, 1024, %s21, [#allocation4], 64, 64, 4
    $region5: #{tpu_custom_call.1} parent=1 // pred_fallthru
      _
    // Predicated region
    $region6: #{tpu_custom_call.1} parent=1 // pred_check
      _
    $region7: #{tpu_custom_call.1} parent=1 // pred_check_branch
      %28 = sbr.rel (0) target = $region9
    $region8: #{tpu_custom_call.1} parent=1 // pred_region
      %30 = vsyncadd [#allocation7], 0
      %s31 = sshll.u32 %s1, 4
      %s32 = int_to_ptr.hbm [resolvable:$true] %s31
      %s33 = sshll.u32 [#allocation6], 4
      %s34 = int_to_ptr.vmem [resolvable:$true] %s33
      %39 = dma.hbm_to_vmem [thread:$0]  %s32, 1024, %s34, [#allocation7], 64, 64, 4
    $region9: #{tpu_custom_call.1} parent=1 // pred_fallthru
      _
    // Predicated region
    $region10: #{tpu_custom_call.1} parent=1 // pred_check
      _
    $region11: #{tpu_custom_call.1} parent=1 // pred_check_branch
      %41 = sbr.rel (0) target = $region13
    $region12: #{tpu_custom_call.1} parent=1 // pred_region
      _
    $region13: #{tpu_custom_call.1} parent=1 // pred_fallthru
      _
    // Predicated region
    $region14: #{tpu_custom_call.1} parent=1 // pred_check
      _
    $region15: #{tpu_custom_call.1} parent=1 // pred_check_branch
      %43 = sbr.rel (0) target = $region17
    $region16: #{tpu_custom_call.1} parent=1 // pred_region
      %45 = vsyncadd [#allocation7], 0
      %s46 = sshll.u32 %s3, 4
      %s47 = int_to_ptr.hbm [resolvable:$true] %s46
      %s48 = sshll.u32 [#allocation8], 4
      %s49 = int_to_ptr.vmem [resolvable:$true] %s48
      %54 = dma.hbm_to_vmem [thread:$0]  %s47, 1024, %s49, [#allocation7], 64, 64, 4
    $region17: #{tpu_custom_call.1} parent=1 // pred_fallthru
      _
    // Predicated region
    $region18: #{tpu_custom_call.1} parent=1 // pred_check
      _
    $region19: #{tpu_custom_call.1} parent=1 // pred_check_branch
      %56 = sbr.rel (0) target = $region21
    $region20: #{tpu_custom_call.1} parent=1 // pred_region
      %58 = vsyncadd [#allocation10], 0
      %s59 = sshll.u32 %s4, 4
      %s60 = int_to_ptr.hbm [resolvable:$true] %s59
      %s61 = sshll.u32 [#allocation9], 4
      %s62 = int_to_ptr.vmem [resolvable:$true] %s61
      %67 = dma.hbm_to_vmem [thread:$0]  %s60, 1024, %s62, [#allocation10], 64, 64, 4
    $region21: #{tpu_custom_call.1} parent=1 // pred_fallthru
      _
    // Predicated region
    $region22: #{tpu_custom_call.1} parent=1 // pred_check
      _
    $region23: #{tpu_custom_call.1} parent=1 // pred_check_branch
      %69 = sbr.rel (0) target = $region25
    $region24: #{tpu_custom_call.1} parent=1 // pred_region
      %71 = dma.done [#allocation4], 1024
    $region25: #{tpu_custom_call.1} parent=1 // pred_fallthru
      _
    // Predicated region
    $region26: #{tpu_custom_call.1} parent=1 // pred_check
      _
    $region27: #{tpu_custom_call.1} parent=1 // pred_check_branch
      %73 = sbr.rel (0) target = $region29
    $region28: #{tpu_custom_call.1} parent=1 // pred_region
      %75 = dma.done [#allocation7], 1024
    $region29: #{tpu_custom_call.1} parent=1 // pred_fallthru
      _
    // Predicated region
    $region30: #{tpu_custom_call.1} parent=1 // pred_check
      _
    $region31: #{tpu_custom_call.1} parent=1 // pred_check_branch
      %77 = sbr.rel (0) target = $region33
    $region32: #{tpu_custom_call.1} parent=1 // pred_region
      %79 = dma.done [#allocation7], 1024
    $region33: #{tpu_custom_call.1} parent=1 // pred_fallthru
      _
    // Predicated region
    $region34: #{tpu_custom_call.1} parent=1 // pred_check
      _
    $region35: #{tpu_custom_call.1} parent=1 // pred_check_branch
      %81 = sbr.rel (0) target = $region37
    $region36: #{tpu_custom_call.1} parent=1 // pred_region
      %83 = dma.done [#allocation10], 1024
    $region37: #{tpu_custom_call.1} parent=1 // pred_fallthru
      _
    %p84 = scmp.eq.s32.totalorder 0, 0
    // Predicated region
    $region38: #{tpu_custom_call.1} parent=1 // pred_check
      %p85 = pneg %p84
    $region39: #{tpu_custom_call.1} parent=1 // pred_check_branch
      %87 = sbr.rel (%p85) target = $region41
    $region40: #{tpu_custom_call.1} parent=1 // pred_region
      %88 = vst [vmem:[#allocation2] sm:$0xff] 0.0
      %89 = vst [vmem:[#allocation2 + $0x8] sm:$0xff] 0.0
      %90 = vst [vmem:[#allocation2 + $0x10] sm:$0xff] 0.0
      %91 = vst [vmem:[#allocation2 + $0x18] sm:$0xff] 0.0
      %92 = vst [vmem:[#allocation2 + $0x20] sm:$0xff] 0.0
      %93 = vst [vmem:[#allocation2 + $0x28] sm:$0xff] 0.0
      %94 = vst [vmem:[#allocation2 + $0x30] sm:$0xff] 0.0
      %95 = vst [vmem:[#allocation2 + $0x38] sm:$0xff] 0.0
      %96 = vst [vmem:[#allocation2 + $0x40] sm:$0xff] 0.0
      %97 = vst [vmem:[#allocation2 + $0x48] sm:$0xff] 0.0
      %98 = vst [vmem:[#allocation2 + $0x50] sm:$0xff] 0.0
      %99 = vst [vmem:[#allocation2 + $0x58] sm:$0xff] 0.0
      %100 = vst [vmem:[#allocation2 + $0x60] sm:$0xff] 0.0
      %101 = vst [vmem:[#allocation2 + $0x68] sm:$0xff] 0.0
      %102 = vst [vmem:[#allocation2 + $0x70] sm:$0xff] 0.0
      %103 = vst [vmem:[#allocation2 + $0x78] sm:$0xff] 0.0
    $region41: #{tpu_custom_call.1} parent=1 // pred_fallthru
      _
    %s104 = smul.u32 0, 128
    %s105 = sshra.s32 %s104, 3
    %s106 = sand.u32 %s104, 7
    %s107 = smul.addr %s105, 4
    %s108 = scalar_lea.vmem [#allocation6], %s107
    %v109 = vld [vmem:[%s108] sm:$0xf]
    %v110 = vld [vmem:[%s108 + $0x4] sm:$0xf]
    %v111 = vld [vmem:[%s108 + $0x8] sm:$0xf]
    %v112 = vld [vmem:[%s108 + $0xc] sm:$0xf]
    %v113 = vld [vmem:[%s108 + $0x10] sm:$0xf]
    %v114 = vld [vmem:[%s108 + $0x14] sm:$0xf]
    %v115 = vld [vmem:[%s108 + $0x18] sm:$0xf]
    %v116 = vld [vmem:[%s108 + $0x1c] sm:$0xf]
    %v117 = vld [vmem:[%s108 + $0x20] sm:$0xf]
    %v118 = vld [vmem:[%s108 + $0x24] sm:$0xf]
    %v119 = vld [vmem:[%s108 + $0x28] sm:$0xf]
    %v120 = vld [vmem:[%s108 + $0x2c] sm:$0xf]
    %v121 = vld [vmem:[%s108 + $0x30] sm:$0xf]
    %v122 = vld [vmem:[%s108 + $0x34] sm:$0xf]
    %v123 = vld [vmem:[%s108 + $0x38] sm:$0xf]
    %v124 = vld [vmem:[%s108 + $0x3c] sm:$0xf]
    %v125 = vld [vmem:[#allocation8] sm:$0xf]
    %v126 = vld [vmem:[#allocation8 + $0x4] sm:$0xf]
    %v127 = vld [vmem:[#allocation8 + $0x8] sm:$0xf]
    %v128 = vld [vmem:[#allocation8 + $0xc] sm:$0xf]
    %v129 = vld [vmem:[#allocation8 + $0x10] sm:$0xf]
    %v130 = vld [vmem:[#allocation8 + $0x14] sm:$0xf]
    %v131 = vld [vmem:[#allocation8 + $0x18] sm:$0xf]
    %v132 = vld [vmem:[#allocation8 + $0x1c] sm:$0xf]
    %v133 = vld [vmem:[#allocation8 + $0x20] sm:$0xf]
    %v134 = vld [vmem:[#allocation8 + $0x24] sm:$0xf]
    %v135 = vld [vmem:[#allocation8 + $0x28] sm:$0xf]
    %v136 = vld [vmem:[#allocation8 + $0x2c] sm:$0xf]
    %v137 = vld [vmem:[#allocation8 + $0x30] sm:$0xf]
    %v138 = vld [vmem:[#allocation8 + $0x34] sm:$0xf]
    %v139 = vld [vmem:[#allocation8 + $0x38] sm:$0xf]
    %v140 = vld [vmem:[#allocation8 + $0x3c] sm:$0xf]
    %v157 = vunpack.c.l.b16 %v109
    %v158 = vunpack.c.l.b16 %v110
    %v159 = vunpack.c.l.b16 %v111
    %v160 = vunpack.c.l.b16 %v112
    %v161 = vunpack.c.l.b16 %v113
    %v162 = vunpack.c.l.b16 %v114
    %v163 = vunpack.c.l.b16 %v115
    %v164 = vunpack.c.l.b16 %v116
    %v165 = vunpack.c.l.b16 %v117
    %v166 = vunpack.c.l.b16 %v118
    %v167 = vunpack.c.l.b16 %v119
    %v168 = vunpack.c.l.b16 %v120
    %v169 = vunpack.c.l.b16 %v121
    %v170 = vunpack.c.l.b16 %v122
    %v171 = vunpack.c.l.b16 %v123
    %v172 = vunpack.c.l.b16 %v124
    %v173 = vpack.c.b16 %v158, %v157
    %v174 = vpack.c.b16 %v160, %v159
    %v175 = vpack.c.b16 %v162, %v161
    %v176 = vpack.c.b16 %v164, %v163
    %v177 = vpack.c.b16 %v166, %v165
    %v178 = vpack.c.b16 %v168, %v167
    %v179 = vpack.c.b16 %v170, %v169
    %v180 = vpack.c.b16 %v172, %v171
    %v205 = vunpack.c.l.b16 %v125
    %v206 = vunpack.c.l.b16 %v126
    %v207 = vunpack.c.l.b16 %v127
    %v208 = vunpack.c.l.b16 %v128
    %v209 = vunpack.c.l.b16 %v129
    %v210 = vunpack.c.l.b16 %v130
    %v211 = vunpack.c.l.b16 %v131
    %v212 = vunpack.c.l.b16 %v132
    %v213 = vunpack.c.l.b16 %v133
    %v214 = vunpack.c.l.b16 %v134
    %v215 = vunpack.c.l.b16 %v135
    %v216 = vunpack.c.l.b16 %v136
    %v217 = vunpack.c.l.b16 %v137
    %v218 = vunpack.c.l.b16 %v138
    %v219 = vunpack.c.l.b16 %v139
    %v220 = vunpack.c.l.b16 %v140
    %v221 = vpack.c.b16 %v206, %v205
    %v222 = vpack.c.b16 %v208, %v207
    %v223 = vpack.c.b16 %v210, %v209
    %v224 = vpack.c.b16 %v212, %v211
    %v225 = vpack.c.b16 %v214, %v213
    %v226 = vpack.c.b16 %v216, %v215
    %v227 = vpack.c.b16 %v218, %v217
    %v228 = vpack.c.b16 %v220, %v219
    %237 = vmatpush.bf16.msra.mxu0 %v228
    %238 = vmatpush.bf16.msra.mxu0 %v227
    %239 = vmatpush.bf16.msra.mxu0 %v226
    %240 = vmatpush.bf16.msra.mxu0 %v225
    %241 = vmatpush.bf16.msra.mxu0 %v224
    %242 = vmatpush.bf16.msra.mxu0 %v223
    %243 = vmatpush.bf16.msra.mxu0 %v222
    %244 = vmatpush.bf16.msra.mxu0 %v221
    %245 = vmatmul.bf16.gmra.mxu0 %v173
    %v246 = vpop.f32.mrf.mxu0
    %v247 = vadd.f32 0.0, %v246
    %v248 = vpop.f32.mrf.mxu0
    %v249 = vadd.f32 0.0, %v248
    %250 = vmatmul.bf16.gmra.mxu0 %v174
    %v251 = vpop.f32.mrf.mxu0
    %v252 = vadd.f32 0.0, %v251
    %v253 = vpop.f32.mrf.mxu0
    %v254 = vadd.f32 0.0, %v253
    %255 = vmatmul.bf16.gmra.mxu0 %v175
    %v256 = vpop.f32.mrf.mxu0
    %v257 = vadd.f32 0.0, %v256
    %v258 = vpop.f32.mrf.mxu0
    %v259 = vadd.f32 0.0, %v258
    %260 = vmatmul.bf16.gmra.mxu0 %v176
    %v261 = vpop.f32.mrf.mxu0
    %v262 = vadd.f32 0.0, %v261
    %v263 = vpop.f32.mrf.mxu0
    %v264 = vadd.f32 0.0, %v263
    %265 = vmatmul.bf16.gmra.mxu0 %v177
    %v266 = vpop.f32.mrf.mxu0
    %v267 = vadd.f32 0.0, %v266
    %v268 = vpop.f32.mrf.mxu0
    %v269 = vadd.f32 0.0, %v268
    %270 = vmatmul.bf16.gmra.mxu0 %v178
    %v271 = vpop.f32.mrf.mxu0
    %v272 = vadd.f32 0.0, %v271
    %v273 = vpop.f32.mrf.mxu0
    %v274 = vadd.f32 0.0, %v273
    %275 = vmatmul.bf16.gmra.mxu0 %v179
    %v276 = vpop.f32.mrf.mxu0
    %v277 = vadd.f32 0.0, %v276
    %v278 = vpop.f32.mrf.mxu0
    %v279 = vadd.f32 0.0, %v278
    %280 = vmatmul.bf16.gmra.mxu0 %v180
    %v281 = vpop.f32.mrf.mxu0
    %v282 = vadd.f32 0.0, %v281
    %v283 = vpop.f32.mrf.mxu0
    %v284 = vadd.f32 0.0, %v283
    %285 = vdwg.mxu0
    %v286 = vpack.c.bf16 %v249, %v247
    %v287 = vpack.c.bf16 %v254, %v252
    %v288 = vpack.c.bf16 %v259, %v257
    %v289 = vpack.c.bf16 %v264, %v262
    %v290 = vpack.c.bf16 %v269, %v267
    %v291 = vpack.c.bf16 %v274, %v272
    %v292 = vpack.c.bf16 %v279, %v277
    %v293 = vpack.c.bf16 %v284, %v282
    %v294 = vld [vmem:[#allocation2] sm:$0xff]
    %v295 = vld [vmem:[#allocation2 + $0x8] sm:$0xff]
    %v296 = vld [vmem:[#allocation2 + $0x10] sm:$0xff]
    %v297 = vld [vmem:[#allocation2 + $0x18] sm:$0xff]
    %v298 = vld [vmem:[#allocation2 + $0x20] sm:$0xff]
    %v299 = vld [vmem:[#allocation2 + $0x28] sm:$0xff]
    %v300 = vld [vmem:[#allocation2 + $0x30] sm:$0xff]
    %v301 = vld [vmem:[#allocation2 + $0x38] sm:$0xff]
    %v302 = vld [vmem:[#allocation2 + $0x40] sm:$0xff]
    %v303 = vld [vmem:[#allocation2 + $0x48] sm:$0xff]
    %v304 = vld [vmem:[#allocation2 + $0x50] sm:$0xff]
    %v305 = vld [vmem:[#allocation2 + $0x58] sm:$0xff]
    %v306 = vld [vmem:[#allocation2 + $0x60] sm:$0xff]
    %v307 = vld [vmem:[#allocation2 + $0x68] sm:$0xff]
    %v308 = vld [vmem:[#allocation2 + $0x70] sm:$0xff]
    %v309 = vld [vmem:[#allocation2 + $0x78] sm:$0xff]
    %v310 = vld [vmem:[#allocation3] sm:$0xf]
    %v311 = vld [vmem:[#allocation3 + $0x4] sm:$0xf]
    %v312 = vld [vmem:[#allocation3 + $0x8] sm:$0xf]
    %v313 = vld [vmem:[#allocation3 + $0xc] sm:$0xf]
    %v314 = vld [vmem:[#allocation3 + $0x10] sm:$0xf]
    %v315 = vld [vmem:[#allocation3 + $0x14] sm:$0xf]
    %v316 = vld [vmem:[#allocation3 + $0x18] sm:$0xf]
    %v317 = vld [vmem:[#allocation3 + $0x1c] sm:$0xf]
    %v318 = vld [vmem:[#allocation3 + $0x20] sm:$0xf]
    %v319 = vld [vmem:[#allocation3 + $0x24] sm:$0xf]
    %v320 = vld [vmem:[#allocation3 + $0x28] sm:$0xf]
    %v321 = vld [vmem:[#allocation3 + $0x2c] sm:$0xf]
    %v322 = vld [vmem:[#allocation3 + $0x30] sm:$0xf]
    %v323 = vld [vmem:[#allocation3 + $0x34] sm:$0xf]
    %v324 = vld [vmem:[#allocation3 + $0x38] sm:$0xf]
    %v325 = vld [vmem:[#allocation3 + $0x3c] sm:$0xf]
    %v342 = vunpack.c.l.b16 %v310
    %v343 = vunpack.c.l.b16 %v311
    %v344 = vunpack.c.l.b16 %v312
    %v345 = vunpack.c.l.b16 %v313
    %v346 = vunpack.c.l.b16 %v314
    %v347 = vunpack.c.l.b16 %v315
    %v348 = vunpack.c.l.b16 %v316
    %v349 = vunpack.c.l.b16 %v317
    %v350 = vunpack.c.l.b16 %v318
    %v351 = vunpack.c.l.b16 %v319
    %v352 = vunpack.c.l.b16 %v320
    %v353 = vunpack.c.l.b16 %v321
    %v354 = vunpack.c.l.b16 %v322
    %v355 = vunpack.c.l.b16 %v323
    %v356 = vunpack.c.l.b16 %v324
    %v357 = vunpack.c.l.b16 %v325
    %v358 = vpack.c.b16 %v343, %v342
    %v359 = vpack.c.b16 %v345, %v344
    %v360 = vpack.c.b16 %v347, %v346
    %v361 = vpack.c.b16 %v349, %v348
    %v362 = vpack.c.b16 %v351, %v350
    %v363 = vpack.c.b16 %v353, %v352
    %v364 = vpack.c.b16 %v355, %v354
    %v365 = vpack.c.b16 %v357, %v356
    %374 = vmatpush.bf16.msra.mxu0 %v293
    %375 = vmatpush.bf16.msra.mxu0 %v292
    %376 = vmatpush.bf16.msra.mxu0 %v291
    %377 = vmatpush.bf16.msra.mxu0 %v290
    %378 = vmatpush.bf16.msra.mxu0 %v289
    %379 = vmatpush.bf16.msra.mxu0 %v288
    %380 = vmatpush.bf16.msra.mxu0 %v287
    %381 = vmatpush.bf16.msra.mxu0 %v286
    %382 = vmatmul.bf16.gmra.mxu0 %v358
    %v383 = vpop.f32.mrf.mxu0
    %v384 = vadd.f32 0.0, %v383
    %v385 = vpop.f32.mrf.mxu0
    %v386 = vadd.f32 0.0, %v385
    %387 = vmatmul.bf16.gmra.mxu0 %v359
    %v388 = vpop.f32.mrf.mxu0
    %v389 = vadd.f32 0.0, %v388
    %v390 = vpop.f32.mrf.mxu0
    %v391 = vadd.f32 0.0, %v390
    %392 = vmatmul.bf16.gmra.mxu0 %v360
    %v393 = vpop.f32.mrf.mxu0
    %v394 = vadd.f32 0.0, %v393
    %v395 = vpop.f32.mrf.mxu0
    %v396 = vadd.f32 0.0, %v395
    %397 = vmatmul.bf16.gmra.mxu0 %v361
    %v398 = vpop.f32.mrf.mxu0
    %v399 = vadd.f32 0.0, %v398
    %v400 = vpop.f32.mrf.mxu0
    %v401 = vadd.f32 0.0, %v400
    %402 = vmatmul.bf16.gmra.mxu0 %v362
    %v403 = vpop.f32.mrf.mxu0
    %v404 = vadd.f32 0.0, %v403
    %v405 = vpop.f32.mrf.mxu0
    %v406 = vadd.f32 0.0, %v405
    %407 = vmatmul.bf16.gmra.mxu0 %v363
    %v408 = vpop.f32.mrf.mxu0
    %v409 = vadd.f32 0.0, %v408
    %v410 = vpop.f32.mrf.mxu0
    %v411 = vadd.f32 0.0, %v410
    %412 = vmatmul.bf16.gmra.mxu0 %v364
    %v413 = vpop.f32.mrf.mxu0
    %v414 = vadd.f32 0.0, %v413
    %v415 = vpop.f32.mrf.mxu0
    %v416 = vadd.f32 0.0, %v415
    %417 = vmatmul.bf16.gmra.mxu0 %v365
    %v418 = vpop.f32.mrf.mxu0
    %v419 = vadd.f32 0.0, %v418
    %v420 = vpop.f32.mrf.mxu0
    %v421 = vadd.f32 0.0, %v420
    %422 = vdwg.mxu0
    %v423 = vadd.f32 %v294, %v384
    %v424 = vadd.f32 %v295, %v386
    %v425 = vadd.f32 %v296, %v389
    %v426 = vadd.f32 %v297, %v391
    %v427 = vadd.f32 %v298, %v394
    %v428 = vadd.f32 %v299, %v396
    %v429 = vadd.f32 %v300, %v399
    %v430 = vadd.f32 %v301, %v401
    %v431 = vadd.f32 %v302, %v404
    %v432 = vadd.f32 %v303, %v406
    %v433 = vadd.f32 %v304, %v409
    %v434 = vadd.f32 %v305, %v411
    %v435 = vadd.f32 %v306, %v414
    %v436 = vadd.f32 %v307, %v416
    %v437 = vadd.f32 %v308, %v419
    %v438 = vadd.f32 %v309, %v421
    %439 = vst [vmem:[#allocation2] sm:$0xff] %v423
    %440 = vst [vmem:[#allocation2 + $0x8] sm:$0xff] %v424
    %441 = vst [vmem:[#allocation2 + $0x10] sm:$0xff] %v425
    %442 = vst [vmem:[#allocation2 + $0x18] sm:$0xff] %v426
    %443 = vst [vmem:[#allocation2 + $0x20] sm:$0xff] %v427
    %444 = vst [vmem:[#allocation2 + $0x28] sm:$0xff] %v428
    %445 = vst [vmem:[#allocation2 + $0x30] sm:$0xff] %v429
    %446 = vst [vmem:[#allocation2 + $0x38] sm:$0xff] %v430
    %447 = vst [vmem:[#allocation2 + $0x40] sm:$0xff] %v431
    %448 = vst [vmem:[#allocation2 + $0x48] sm:$0xff] %v432
    %449 = vst [vmem:[#allocation2 + $0x50] sm:$0xff] %v433
    %450 = vst [vmem:[#allocation2 + $0x58] sm:$0xff] %v434
    %451 = vst [vmem:[#allocation2 + $0x60] sm:$0xff] %v435
    %452 = vst [vmem:[#allocation2 + $0x68] sm:$0xff] %v436
    %453 = vst [vmem:[#allocation2 + $0x70] sm:$0xff] %v437
    %454 = vst [vmem:[#allocation2 + $0x78] sm:$0xff] %v438
    // Predicated region
    $region42: #{tpu_custom_call.1} parent=1 // pred_check
      %p455 = pneg %p84
    $region43: #{tpu_custom_call.1} parent=1 // pred_check_branch
      %457 = sbr.rel (%p455) target = $region45
    $region44: #{tpu_custom_call.1} parent=1 // pred_region
      %v458 = vld [vmem:[#allocation2] sm:$0xff]
      %v459 = vld [vmem:[#allocation2 + $0x8] sm:$0xff]
      %v460 = vld [vmem:[#allocation2 + $0x10] sm:$0xff]
      %v461 = vld [vmem:[#allocation2 + $0x18] sm:$0xff]
      %v462 = vld [vmem:[#allocation2 + $0x20] sm:$0xff]
      %v463 = vld [vmem:[#allocation2 + $0x28] sm:$0xff]
      %v464 = vld [vmem:[#allocation2 + $0x30] sm:$0xff]
      %v465 = vld [vmem:[#allocation2 + $0x38] sm:$0xff]
      %v466 = vld [vmem:[#allocation2 + $0x40] sm:$0xff]
      %v467 = vld [vmem:[#allocation2 + $0x48] sm:$0xff]
      %v468 = vld [vmem:[#allocation2 + $0x50] sm:$0xff]
      %v469 = vld [vmem:[#allocation2 + $0x58] sm:$0xff]
      %v470 = vld [vmem:[#allocation2 + $0x60] sm:$0xff]
      %v471 = vld [vmem:[#allocation2 + $0x68] sm:$0xff]
      %v472 = vld [vmem:[#allocation2 + $0x70] sm:$0xff]
      %v473 = vld [vmem:[#allocation2 + $0x78] sm:$0xff]
      %v474 = vld [vmem:[%s2] sm:$0x1]
      %v476 = vperm.slane %v474, 0
      %v478 = vadd.f32 %v458, %v476
      %v479 = vadd.f32 %v459, %v476
      %v480 = vadd.f32 %v460, %v476
      %v481 = vadd.f32 %v461, %v476
      %v482 = vadd.f32 %v462, %v476
      %v483 = vadd.f32 %v463, %v476
      %v484 = vadd.f32 %v464, %v476
      %v485 = vadd.f32 %v465, %v476
      %v486 = vadd.f32 %v466, %v476
      %v487 = vadd.f32 %v467, %v476
      %v488 = vadd.f32 %v468, %v476
      %v489 = vadd.f32 %v469, %v476
      %v490 = vadd.f32 %v470, %v476
      %v491 = vadd.f32 %v471, %v476
      %v492 = vadd.f32 %v472, %v476
      %v493 = vadd.f32 %v473, %v476
      %v494 = vmax.f32 %v478, 0.0
      %v495 = vmax.f32 %v479, 0.0
      %v496 = vmax.f32 %v480, 0.0
      %v497 = vmax.f32 %v481, 0.0
      %v498 = vmax.f32 %v482, 0.0
      %v499 = vmax.f32 %v483, 0.0
      %v500 = vmax.f32 %v484, 0.0
      %v501 = vmax.f32 %v485, 0.0
      %v502 = vmax.f32 %v486, 0.0
      %v503 = vmax.f32 %v487, 0.0
      %v504 = vmax.f32 %v488, 0.0
      %v505 = vmax.f32 %v489, 0.0
      %v506 = vmax.f32 %v490, 0.0
      %v507 = vmax.f32 %v491, 0.0
      %v508 = vmax.f32 %v492, 0.0
      %v509 = vmax.f32 %v493, 0.0
      %v510 = vpack.c.bf16 %v495, %v494
      %v511 = vpack.c.bf16 %v497, %v496
      %v512 = vpack.c.bf16 %v499, %v498
      %v513 = vpack.c.bf16 %v501, %v500
      %v514 = vpack.c.bf16 %v503, %v502
      %v515 = vpack.c.bf16 %v505, %v504
      %v516 = vpack.c.bf16 %v507, %v506
      %v517 = vpack.c.bf16 %v509, %v508
      %v518 = vld [vmem:[#allocation9] sm:$0xf]
      %v519 = vld [vmem:[#allocation9 + $0x4] sm:$0xf]
      %v520 = vld [vmem:[#allocation9 + $0x8] sm:$0xf]
      %v521 = vld [vmem:[#allocation9 + $0xc] sm:$0xf]
      %v522 = vld [vmem:[#allocation9 + $0x10] sm:$0xf]
      %v523 = vld [vmem:[#allocation9 + $0x14] sm:$0xf]
      %v524 = vld [vmem:[#allocation9 + $0x18] sm:$0xf]
      %v525 = vld [vmem:[#allocation9 + $0x1c] sm:$0xf]
      %v526 = vld [vmem:[#allocation9 + $0x20] sm:$0xf]
      %v527 = vld [vmem:[#allocation9 + $0x24] sm:$0xf]
      %v528 = vld [vmem:[#allocation9 + $0x28] sm:$0xf]
      %v529 = vld [vmem:[#allocation9 + $0x2c] sm:$0xf]
      %v530 = vld [vmem:[#allocation9 + $0x30] sm:$0xf]
      %v531 = vld [vmem:[#allocation9 + $0x34] sm:$0xf]
      %v532 = vld [vmem:[#allocation9 + $0x38] sm:$0xf]
      %v533 = vld [vmem:[#allocation9 + $0x3c] sm:$0xf]
      %v550 = vunpack.c.l.b16 %v518
      %v551 = vunpack.c.l.b16 %v519
      %v552 = vunpack.c.l.b16 %v520
      %v553 = vunpack.c.l.b16 %v521
      %v554 = vunpack.c.l.b16 %v522
      %v555 = vunpack.c.l.b16 %v523
      %v556 = vunpack.c.l.b16 %v524
      %v557 = vunpack.c.l.b16 %v525
      %v558 = vunpack.c.l.b16 %v526
      %v559 = vunpack.c.l.b16 %v527
      %v560 = vunpack.c.l.b16 %v528
      %v561 = vunpack.c.l.b16 %v529
      %v562 = vunpack.c.l.b16 %v530
      %v563 = vunpack.c.l.b16 %v531
      %v564 = vunpack.c.l.b16 %v532
      %v565 = vunpack.c.l.b16 %v533
      %v566 = vpack.c.b16 %v551, %v550
      %v567 = vpack.c.b16 %v553, %v552
      %v568 = vpack.c.b16 %v555, %v554
      %v569 = vpack.c.b16 %v557, %v556
      %v570 = vpack.c.b16 %v559, %v558
      %v571 = vpack.c.b16 %v561, %v560
      %v572 = vpack.c.b16 %v563, %v562
      %v573 = vpack.c.b16 %v565, %v564
      %582 = vmatpush.bf16.msra.mxu0 %v573
      %583 = vmatpush.bf16.msra.mxu0 %v572
      %584 = vmatpush.bf16.msra.mxu0 %v571
      %585 = vmatpush.bf16.msra.mxu0 %v570
      %586 = vmatpush.bf16.msra.mxu0 %v569
      %587 = vmatpush.bf16.msra.mxu0 %v568
      %588 = vmatpush.bf16.msra.mxu0 %v567
      %589 = vmatpush.bf16.msra.mxu0 %v566
      %590 = vmatmul.bf16.gmra.mxu0 %v510
      %v591 = vpop.f32.mrf.mxu0
      %v592 = vadd.f32 0.0, %v591
      %v593 = vpop.f32.mrf.mxu0
      %v594 = vadd.f32 0.0, %v593
      %595 = vmatmul.bf16.gmra.mxu0 %v511
      %v596 = vpop.f32.mrf.mxu0
      %v597 = vadd.f32 0.0, %v596
      %v598 = vpop.f32.mrf.mxu0
      %v599 = vadd.f32 0.0, %v598
      %600 = vmatmul.bf16.gmra.mxu0 %v512
      %v601 = vpop.f32.mrf.mxu0
      %v602 = vadd.f32 0.0, %v601
      %v603 = vpop.f32.mrf.mxu0
      %v604 = vadd.f32 0.0, %v603
      %605 = vmatmul.bf16.gmra.mxu0 %v513
      %v606 = vpop.f32.mrf.mxu0
      %v607 = vadd.f32 0.0, %v606
      %v608 = vpop.f32.mrf.mxu0
      %v609 = vadd.f32 0.0, %v608
      %610 = vmatmul.bf16.gmra.mxu0 %v514
      %v611 = vpop.f32.mrf.mxu0
      %v612 = vadd.f32 0.0, %v611
      %v613 = vpop.f32.mrf.mxu0
      %v614 = vadd.f32 0.0, %v613
      %615 = vmatmul.bf16.gmra.mxu0 %v515
      %v616 = vpop.f32.mrf.mxu0
      %v617 = vadd.f32 0.0, %v616
      %v618 = vpop.f32.mrf.mxu0
      %v619 = vadd.f32 0.0, %v618
      %620 = vmatmul.bf16.gmra.mxu0 %v516
      %v621 = vpop.f32.mrf.mxu0
      %v622 = vadd.f32 0.0, %v621
      %v623 = vpop.f32.mrf.mxu0
      %v624 = vadd.f32 0.0, %v623
      %625 = vmatmul.bf16.gmra.mxu0 %v517
      %v626 = vpop.f32.mrf.mxu0
      %v627 = vadd.f32 0.0, %v626
      %v628 = vpop.f32.mrf.mxu0
      %v629 = vadd.f32 0.0, %v628
      %630 = vdwg.mxu0
      %v631 = vpack.c.bf16 %v592, %v592
      %v632 = vpack.c.bf16 %v594, %v594
      %v633 = vpack.c.bf16 %v597, %v597
      %v634 = vpack.c.bf16 %v599, %v599
      %v635 = vpack.c.bf16 %v602, %v602
      %v636 = vpack.c.bf16 %v604, %v604
      %v637 = vpack.c.bf16 %v607, %v607
      %v638 = vpack.c.bf16 %v609, %v609
      %v639 = vpack.c.bf16 %v612, %v612
      %v640 = vpack.c.bf16 %v614, %v614
      %v641 = vpack.c.bf16 %v617, %v617
      %v642 = vpack.c.bf16 %v619, %v619
      %v643 = vpack.c.bf16 %v622, %v622
      %v644 = vpack.c.bf16 %v624, %v624
      %v645 = vpack.c.bf16 %v627, %v627
      %v646 = vpack.c.bf16 %v629, %v629
      %647 = vst [vmem:[#allocation11] sm:$0xf] %v631
      %648 = vst [vmem:[#allocation11 + $0x4] sm:$0xf] %v632
      %649 = vst [vmem:[#allocation11 + $0x8] sm:$0xf] %v633
      %650 = vst [vmem:[#allocation11 + $0xc] sm:$0xf] %v634
      %651 = vst [vmem:[#allocation11 + $0x10] sm:$0xf] %v635
      %652 = vst [vmem:[#allocation11 + $0x14] sm:$0xf] %v636
      %653 = vst [vmem:[#allocation11 + $0x18] sm:$0xf] %v637
      %654 = vst [vmem:[#allocation11 + $0x1c] sm:$0xf] %v638
      %655 = vst [vmem:[#allocation11 + $0x20] sm:$0xf] %v639
      %656 = vst [vmem:[#allocation11 + $0x24] sm:$0xf] %v640
      %657 = vst [vmem:[#allocation11 + $0x28] sm:$0xf] %v641
      %658 = vst [vmem:[#allocation11 + $0x2c] sm:$0xf] %v642
      %659 = vst [vmem:[#allocation11 + $0x30] sm:$0xf] %v643
      %660 = vst [vmem:[#allocation11 + $0x34] sm:$0xf] %v644
      %661 = vst [vmem:[#allocation11 + $0x38] sm:$0xf] %v645
      %662 = vst [vmem:[#allocation11 + $0x3c] sm:$0xf] %v646
    $region45: #{tpu_custom_call.1} parent=1 // pred_fallthru
      _
    // Predicated region
    $region46: #{tpu_custom_call.1} parent=1 // pred_check
      _
    $region47: #{tpu_custom_call.1} parent=1 // pred_check_branch
      %664 = sbr.rel (0) target = $region49
    $region48: #{tpu_custom_call.1} parent=1 // pred_region
      %666 = vsyncadd [#allocation5], 0
      %s667 = sshll.u32 [#allocation11], 4
      %s668 = int_to_ptr.vmem [resolvable:$true] %s667
      %s669 = sshll.u32 %s5, 4
      %s670 = int_to_ptr.hbm [resolvable:$true] %s669
      %675 = dma.vmem_to_hbm [thread:$0]  %s668, 1024, %s670, [#allocation5], 64, 64, 4
    $region49: #{tpu_custom_call.1} parent=1 // pred_fallthru
      _
    // Predicated region
    $region50: #{tpu_custom_call.1} parent=1 // pred_check
      _
    $region51: #{tpu_custom_call.1} parent=1 // pred_check_branch
      %677 = sbr.rel (0) target = $region53
    $region52: #{tpu_custom_call.1} parent=1 // pred_region
      %679 = dma.done [#allocation5], 1024
    $region53: #{tpu_custom_call.1} parent=1 // pred_fallthru
      _
    %680 = vsyncpa [#allocation4], 1
    %681 = vsyncpa [#allocation7], 1
    %682 = vsyncpa [#allocation10], 1
    %683 = vsyncpa [#allocation5], 1

</llo_original>
